<compile_context>
chip_gen: v7x
topology: tpu7x:2x2x1
jax: 0.10.0
libtpu: 0.0.40
codegen_flags: <defaults>
</compile_context>

<pallas_src>
import functools
import math

import jax
import jax.numpy as jnp
from jax.experimental import pallas as pl
from jax.experimental.pallas import tpu as pltpu

NEG_INF_FILL = -1000000000.0

_MIB = 1024 * 1024
_VMEM_TARGET = 40 * _MIB      # shrink tiles until the padded estimate fits this
_VMEM_LIMIT_CAP = 56 * _MIB   # stays under v7x's 64 MiB physical VMEM


# ----------------------------------------------------------------------------
# Sizing helpers
# ----------------------------------------------------------------------------

def _cdiv(a, b):
    return -(-a // b)


def _padded_tile_bytes(shape, dtype):
    """Bytes of one VMEM-resident tile, including lane/sublane padding."""
    itemsize = jnp.dtype(dtype).itemsize
    dims = list(shape)
    if not dims:
        return itemsize
    dims[-1] = _cdiv(dims[-1], 128) * 128
    if len(dims) >= 2:
        sublane = max(8, 32 // itemsize)      # 8 f32 / 16 bf16 / 32 int8
        dims[-2] = _cdiv(dims[-2], sublane) * sublane
    n = 1
    for d in dims:
        n *= d
    return n * itemsize


def _choose_head_block(n_head, d_head):
    """Smallest head block whose fused context width is a multiple of 128."""
    for hb in range(1, n_head + 1):
        if n_head % hb == 0 and (hb * d_head) % 128 == 0:
            return hb
    return n_head          # fused width == full d_hidn (always a legal block)


def _choose_seq_tile(n_seq, prefs=(512, 256, 128)):
    for t in prefs:
        if n_seq % t == 0:
            return t
    return n_seq


def _vmem_estimate(hb, tq, kv_len, n_seq, d_head, in_dtype, prob_dtype,
                   with_probs, mask_q_len):
    """Padded, double-buffered working-set estimate for one grid step."""
    est = 0
    est += 2 * _padded_tile_bytes((hb, tq, d_head), in_dtype)           # Q
    est += 2 * 2 * _padded_tile_bytes((hb, kv_len, d_head), in_dtype)   # K, V
    est += 2 * _padded_tile_bytes((mask_q_len, kv_len), jnp.float32)    # bias
    est += 2 * _padded_tile_bytes((tq, hb * d_head), in_dtype)          # ctx out
    if with_probs:
        est += 2 * _padded_tile_bytes((hb, tq, n_seq), prob_dtype)      # prob out
    # live f32 intermediates (scores, exp, prob-in-flight)
    est += 3 * _padded_tile_bytes((hb, tq, kv_len), jnp.float32)
    # online-softmax scratch (flash path; negligible otherwise)
    est += 2 * _padded_tile_bytes((hb, tq, 1), jnp.float32)
    est += _padded_tile_bytes((hb, tq, d_head), jnp.float32)
    est += 2 * _MIB                                                     # margin
    return est


# ----------------------------------------------------------------------------
# Kernels
# ----------------------------------------------------------------------------

def _sdpa_probs_kernel(q_ref, k_ref, v_ref, bias_ref, ctx_ref, prob_ref):
    """Exact softmax over the full key axis for one (batch, head-block, q-tile)."""
    q = q_ref[0]            # (hb, tq, d_head)
    k = k_ref[0]            # (hb, n_seq, d_head)
    v = v_ref[0]            # (hb, n_seq, d_head)
    bias = bias_ref[0]      # (1 or tq, n_seq) additive mask bias (0 / -1e9)

    d_head = q.shape[-1]
    scale = 1.0 / math.sqrt(d_head)

    # Fold the scale into Q (an (hb,tq,d) op, not (hb,tq,n_seq)); bf16 MXU
    # operands with f32 accumulation.
    qs = (q * scale).astype(jnp.bfloat16)
    s = jnp.einsum("hqd,hkd->hqk", qs, k.astype(jnp.bfloat16),
                   preferred_element_type=jnp.float32)
    # Head (and, for pad masks, query) broadcast of the bias: free VPU add.
    s = s + bias[None]

    # Softmax statistics in f32; EXACT divide for the returned probabilities.
    s_max = jnp.max(s, axis=-1, keepdims=True)
    e = jnp.exp(s - s_max)
    p = e / jnp.sum(e, axis=-1, keepdims=True)

    # TODO(synk): attention-prob dropout omitted (eval / p=0); training would
    # need pltpu.prng_seed + pltpu.stateful_bernoulli here.
    ctx = jnp.einsum("hqk,hkd->hqd", p.astype(jnp.bfloat16),
                     v.astype(jnp.bfloat16),
                     preferred_element_type=jnp.float32)

    prob_ref[0] = p.astype(prob_ref.dtype)
    hb = ctx.shape[0]
    for hh in range(hb):    # lane-dense (tq, hb*d_head) context block
        ctx_ref[0, :, hh * d_head:(hh + 1) * d_head] = ctx[hh].astype(ctx_ref.dtype)


def _sdpa_flash_kernel(q_ref, k_ref, v_ref, bias_ref, ctx_ref,
                       m_sc, l_sc, acc_sc):
    """Context-only, key-tiled (online-softmax) kernel."""
    ki = pl.program_id(3)

    @pl.when(ki == 0)
    def _():
        m_sc[...] = jnp.full_like(m_sc, -jnp.inf)
        l_sc[...] = jnp.zeros_like(l_sc)
        acc_sc[...] = jnp.zeros_like(acc_sc)

    q = q_ref[0]            # (hb, tq, d_head)
    k = k_ref[0]            # (hb, tk, d_head)
    v = v_ref[0]            # (hb, tk, d_head)
    bias = bias_ref[0]      # (1 or tq, tk)

    d_head = q.shape[-1]
    scale = 1.0 / math.sqrt(d_head)
    qs = (q * scale).astype(jnp.bfloat16)
    s = jnp.einsum("hqd,hkd->hqk", qs, k.astype(jnp.bfloat16),
                   preferred_element_type=jnp.float32)
    s = s + bias[None]

    m_prev = m_sc[...]
    m_new = jnp.maximum(m_prev, jnp.max(s, axis=-1, keepdims=True))
    alpha = jnp.exp(m_prev - m_new)
    p = jnp.exp(s - m_new)
    l_sc[...] = alpha * l_sc[...] + jnp.sum(p, axis=-1, keepdims=True)
    acc_sc[...] = alpha * acc_sc[...] + jnp.einsum(
        "hqk,hkd->hqd", p.astype(jnp.bfloat16), v.astype(jnp.bfloat16),
        preferred_element_type=jnp.float32)
    m_sc[...] = m_new

    @pl.when(ki == pl.num_programs(3) - 1)
    def _():
        # Final normalization: approx reciprocal lands on the idle EUP slot
        # (context only; the probs path above uses an exact divide).
        ctx = acc_sc[...] * pl.reciprocal(l_sc[...], approx=True)
        hb = ctx.shape[0]
        for hh in range(hb):
            ctx_ref[0, :, hh * d_head:(hh + 1) * d_head] = ctx[hh].astype(ctx_ref.dtype)


# ----------------------------------------------------------------------------
# Wrapper
# ----------------------------------------------------------------------------

def _normalize_mask_bias(attn_mask, bs, n_seq):
    """Return an additive f32 bias: (bs, 1, n_seq) (pad vector) or (bs, n_seq, n_seq)."""
    m = attn_mask
    if m.ndim == 4:
        # TODO(synk): only head 0 is kept; SpanBERT's pad mask is identical
        # across heads. A genuinely head-dependent mask is NOT supported here.
        m = m[:, 0]
    if m.ndim == 2:
        if m.shape == (bs, n_seq):                 # key-pad vector
            m = m[:, None, :]                      # (bs, 1, n_seq)
        else:                                      # (n_seq, n_seq) shared mask
            m = jnp.broadcast_to(m[None], (bs, n_seq, n_seq))
    # m is now (bs, 1, n_seq) or (bs, n_seq, n_seq)
    return (m != 0).astype(jnp.float32) * NEG_INF_FILL


def scaled_dot_product_attention(q, k, v, attn_mask, *,
                                 return_probs=True,
                                 prob_dtype=jnp.bfloat16,
                                 context_layout="bhsd"):
    """SpanBERT ScaledDotProductAttention forward.

    Q, K, V: (bs, n_head, n_seq, d_head).
    attn_mask: True / nonzero => masked. Accepted shapes:
      (bs, n_seq)                       key-pad vector (preferred: never
                                        materializes an (n_seq, n_seq) mask),
      (bs, 1, n_seq), (n_seq, n_seq), (bs, n_seq, n_seq),
      (bs, n_head, n_seq, n_seq)        (head dim must be redundant).

    Returns (context, attn_prob):
      context: (bs, n_head, n_seq, d_head) for context_layout="bhsd" (module
               layout) or (bs, n_seq, n_head*d_head) for "bsd" (lane-dense,
               what the downstream output projection wants).
      attn_prob: (bs, n_head, n_seq, n_seq) in `prob_dtype`, or None when
               return_probs=False (flash path, skips the O(n_seq^2) writeback).
    """
    bs, n_head, n_seq, d_head = q.shape
    d_hidn = n_head * d_head

    bias = _normalize_mask_bias(attn_mask, bs, n_seq)
    mask_q_len = bias.shape[1]                  # 1 (pad vector) or n_seq (full)

    hb = _choose_head_block(n_head, d_head)
    n_hb = n_head // hb
    tq = _choose_seq_tile(n_seq)
    kv_len = n_seq if return_probs else _choose_seq_tile(n_seq)

    # Shrink the query tile until the padded, double-buffered estimate fits.
    while (_vmem_estimate(hb, tq, kv_len, n_seq, d_head, q.dtype, prob_dtype,
                          return_probs, min(mask_q_len, tq)) > _VMEM_TARGET
           and tq > 128 and tq % 2 == 0):
        tq //= 2
    est = _vmem_estimate(hb, tq, kv_len, n_seq, d_head, q.dtype, prob_dtype,
                         return_probs, min(mask_q_len, tq))
    vmem_limit = int(min(max(est + 8 * _MIB, 24 * _MIB), _VMEM_LIMIT_CAP))

    n_qb = n_seq // tq
    qkv_block = lambda length: (1, hb, length, d_head)
    ctx_shape = jax.ShapeDtypeStruct((bs, n_seq, d_hidn), q.dtype)

    if return_probs:
        # Exact softmax over the full key axis; only (hb, tq, n_seq) f32 live.
        if mask_q_len == 1:
            bias_spec = pl.BlockSpec((1, 1, n_seq), lambda b, h, qi: (b, 0, 0))
        else:
            bias_spec = pl.BlockSpec((1, tq, n_seq), lambda b, h, qi: (b, qi, 0))
        in_specs = [
            pl.BlockSpec(qkv_block(tq), lambda b, h, qi: (b, h, qi, 0)),
            # K/V block index is constant across qi (innermost axis) => the
            # blocks stay VMEM-resident across the whole query sweep.
            pl.BlockSpec(qkv_block(n_seq), lambda b, h, qi: (b, h, 0, 0)),
            pl.BlockSpec(qkv_block(n_seq), lambda b, h, qi: (b, h, 0, 0)),
            bias_spec,
        ]
        out_specs = (
            pl.BlockSpec((1, tq, hb * d_head), lambda b, h, qi: (b, qi, h)),
            pl.BlockSpec((1, hb, tq, n_seq), lambda b, h, qi: (b, h, qi, 0)),
        )
        out_shape = (ctx_shape,
                     jax.ShapeDtypeStruct((bs, n_head, n_seq, n_seq), prob_dtype))
        ctx_fused, prob = pl.pallas_call(
            _sdpa_probs_kernel,
            out_shape=out_shape,
            grid=(bs, n_hb, n_qb),
            in_specs=in_specs,
            out_specs=out_specs,
            compiler_params=pltpu.CompilerParams(
                dimension_semantics=("parallel", "parallel", "parallel"),
                vmem_limit_bytes=vmem_limit),
        )(q, k, v, bias)
    else:
        # Flash-style: key-block grid axis ("arbitrary") + online softmax.
        tk = kv_len
        n_kb = n_seq // tk
        if mask_q_len == 1:
            bias_spec = pl.BlockSpec((1, 1, tk), lambda b, h, qi, ki: (b, 0, ki))
        else:
            bias_spec = pl.BlockSpec((1, tq, tk), lambda b, h, qi, ki: (b, qi, ki))
        in_specs = [
            pl.BlockSpec(qkv_block(tq), lambda b, h, qi, ki: (b, h, qi, 0)),
            pl.BlockSpec(qkv_block(tk), lambda b, h, qi, ki: (b, h, ki, 0)),
            pl.BlockSpec(qkv_block(tk), lambda b, h, qi, ki: (b, h, ki, 0)),
            bias_spec,
        ]
        out_specs = pl.BlockSpec((1, tq, hb * d_head),
                                 lambda b, h, qi, ki: (b, qi, h))
        ctx_fused = pl.pallas_call(
            _sdpa_flash_kernel,
            out_shape=ctx_shape,
            grid=(bs, n_hb, n_qb, n_kb),
            in_specs=in_specs,
            out_specs=out_specs,
            scratch_shapes=[pltpu.VMEM((hb, tq, 1), jnp.float32),
                            pltpu.VMEM((hb, tq, 1), jnp.float32),
                            pltpu.VMEM((hb, tq, d_head), jnp.float32)],
            compiler_params=pltpu.CompilerParams(
                dimension_semantics=("parallel", "parallel", "parallel",
                                     "arbitrary"),
                vmem_limit_bytes=vmem_limit),
        )(q, k, v, bias)
        prob = None

    if context_layout == "bsd":
        ctx = ctx_fused                       # (bs, n_seq, d_hidn) lane-dense
    else:                                     # "bhsd": module-faithful layout
        ctx = ctx_fused.reshape(bs, n_seq, n_head, d_head).transpose(0, 2, 1, 3)
    return ctx, prob


# ----------------------------------------------------------------------------
# Driver (small shapes; tune/benchmark at n_seq>=512, d_head=64, n_head>=12)
# ----------------------------------------------------------------------------

if __name__ == "__main__":
    bs, n_head, n_seq, d_head = 2, 4, 8, 8        # d_hidn = 32

    root = jax.random.PRNGKey(0)
    kq, kk, kv = jax.random.split(root, 3)
    q = jax.random.normal(kq, (bs, n_head, n_seq, d_head), jnp.float32)
    k = jax.random.normal(kk, (bs, n_head, n_seq, d_head), jnp.float32)
    v = jax.random.normal(kv, (bs, n_head, n_seq, d_head), jnp.float32)

    # Key-pad mask (True => masked): last 2 key positions padded, shared
    # across queries and heads, like SpanBERT's get_attn_pad_mask.
    key_is_pad = jnp.zeros((bs, n_seq), dtype=bool).at[:, -2:].set(True)
    attn_mask_4d = jnp.broadcast_to(key_is_pad[:, None, None, :],
                                    (bs, n_head, n_seq, n_seq))

    # Plain-JAX reference with PyTorch semantics (f32, exact softmax).
    scale = 1.0 / math.sqrt(d_head)
    scores_ref = jnp.einsum("bhqd,bhkd->bhqk", q, k) * scale
    scores_ref = jnp.where(attn_mask_4d, NEG_INF_FILL, scores_ref)
    prob_ref = jax.nn.softmax(scores_ref, axis=-1)
    ctx_ref = jnp.einsum("bhqk,bhkd->bhqd", prob_ref, v)

    # 1) Module-faithful call: 4D mask, context + probabilities.
    fwd = jax.jit(functools.partial(scaled_dot_product_attention,
                                    return_probs=True))
    ctx, prob = fwd(q, k, v, attn_mask_4d)
    jax.block_until_ready((ctx, prob))

    assert ctx.shape == (bs, n_head, n_seq, d_head)
    assert prob.shape == (bs, n_head, n_seq, n_seq)
    assert bool(jnp.all(jnp.isfinite(ctx))) and bool(jnp.all(jnp.isfinite(prob)))
    prob32 = prob.astype(jnp.float32)
    assert bool(jnp.allclose(prob32.sum(axis=-1), 1.0, atol=2e-2))
    assert bool(jnp.allclose(prob32, prob_ref, rtol=0.0, atol=5e-2))
    assert bool(jnp.allclose(ctx, ctx_ref, rtol=0.0, atol=1e-1))
    assert bool(jnp.all(prob32[..., -2:] < 1e-3))     # masked keys ~ zero prob

    # 2) Pad-mask-vector path: no (n_seq, n_seq) mask ever materialized.
    ctx_v, prob_v = fwd(q, k, v, key_is_pad)
    jax.block_until_ready((ctx_v, prob_v))
    assert bool(jnp.allclose(ctx_v, ctx, rtol=0.0, atol=1e-5))
    assert bool(jnp.allclose(prob_v.astype(jnp.float32), prob32,
                             rtol=0.0, atol=1e-5))

    # 3) Context-only flash path (key-tiled online softmax), lane-dense layout.
    fwd_ctx = jax.jit(functools.partial(scaled_dot_product_attention,
                                        return_probs=False,
                                        context_layout="bsd"))
    ctx_f, prob_none = fwd_ctx(q, k, v, key_is_pad)
    jax.block_until_ready(ctx_f)
    assert prob_none is None
    assert ctx_f.shape == (bs, n_seq, n_head * d_head)
    ctx_f_bhsd = ctx_f.reshape(bs, n_seq, n_head, d_head).transpose(0, 2, 1, 3)
    assert bool(jnp.allclose(ctx_f_bhsd, ctx_ref, rtol=0.0, atol=1e-1))

    print("KERNEL_OK")
</pallas_src>

<mosaic_0001>
module attributes {stable_mosaic.version = 11 : i64} {
  func.func @_sdpa_probs_kernel(%arg0: i32, %arg1: i32, %arg2: i32, %arg3: memref<1x4x8x8xf32, #tpu.memory_space<vmem>>, %arg4: memref<1x4x8x8xf32, #tpu.memory_space<vmem>>, %arg5: memref<1x4x8x8xf32, #tpu.memory_space<vmem>>, %arg6: memref<1x8x8xf32, #tpu.memory_space<vmem>>, %arg7: memref<1x8x32xf32, #tpu.memory_space<vmem>>, %arg8: memref<1x4x8x8xbf16, #tpu.memory_space<vmem>>) attributes {dimension_semantics = [#tpu.dimension_semantics<parallel>, #tpu.dimension_semantics<parallel>, #tpu.dimension_semantics<parallel>], iteration_bounds = array<i64: 2, 1, 1>, scalar_prefetch = 0 : i64, scratch_operands = 0 : i64, tpu.core_type = #tpu.core_type<tc>, window_params = [{transform_indices = @transform_0, window_bounds = array<i64: 1, 4, 8, 8>}, {transform_indices = @transform_1, window_bounds = array<i64: 1, 4, 8, 8>}, {transform_indices = @transform_2, window_bounds = array<i64: 1, 4, 8, 8>}, {transform_indices = @transform_3, window_bounds = array<i64: 1, 8, 8>}, {transform_indices = @transform_4, window_bounds = array<i64: 1, 8, 32>}, {transform_indices = @transform_5, window_bounds = array<i64: 1, 4, 8, 8>}]} {
    %c0 = arith.constant 0 : index
    %c0_0 = arith.constant 0 : index
    %c0_1 = arith.constant 0 : index
    %c0_2 = arith.constant 0 : index
    %0 = vector.load %arg3[%c0, %c0_0, %c0_1, %c0_2] : memref<1x4x8x8xf32, #tpu.memory_space<vmem>>, vector<1x4x8x8xf32>
    %1 = vector.shape_cast %0 : vector<1x4x8x8xf32> to vector<4x8x8xf32>
    %c0_3 = arith.constant 0 : index
    %c0_4 = arith.constant 0 : index
    %c0_5 = arith.constant 0 : index
    %c0_6 = arith.constant 0 : index
    %2 = vector.load %arg4[%c0_3, %c0_4, %c0_5, %c0_6] : memref<1x4x8x8xf32, #tpu.memory_space<vmem>>, vector<1x4x8x8xf32>
    %3 = vector.shape_cast %2 : vector<1x4x8x8xf32> to vector<4x8x8xf32>
    %c0_7 = arith.constant 0 : index
    %c0_8 = arith.constant 0 : index
    %c0_9 = arith.constant 0 : index
    %c0_10 = arith.constant 0 : index
    %4 = vector.load %arg5[%c0_7, %c0_8, %c0_9, %c0_10] : memref<1x4x8x8xf32, #tpu.memory_space<vmem>>, vector<1x4x8x8xf32>
    %5 = vector.shape_cast %4 : vector<1x4x8x8xf32> to vector<4x8x8xf32>
    %c0_11 = arith.constant 0 : index
    %c0_12 = arith.constant 0 : index
    %c0_13 = arith.constant 0 : index
    %6 = vector.load %arg6[%c0_11, %c0_12, %c0_13] : memref<1x8x8xf32, #tpu.memory_space<vmem>>, vector<1x8x8xf32>
    %7 = vector.shape_cast %6 : vector<1x8x8xf32> to vector<8x8xf32>
    %cst = arith.constant 0.353553385 : f32
    %8 = vector.broadcast %cst : f32 to vector<4x8x8xf32>
    %9 = arith.mulf %1, %8 : vector<4x8x8xf32>
    %10 = arith.truncf %9 : vector<4x8x8xf32> to vector<4x8x8xbf16>
    %11 = arith.truncf %3 : vector<4x8x8xf32> to vector<4x8x8xbf16>
    "tpu.trace_start"() <{level = 10 : i32, message = "hqd,hkd->hqk"}> : () -> ()
    %cst_14 = arith.constant dense<0.000000e+00> : vector<4x8x8xf32>
    %12 = tpu.matmul %10, %11, %cst_14 {dimension_numbers = #tpu.dot_dimension_numbers<[2], [2], [1], [1], [0, 0, 0, 1, 1, 1], [0], [0]>} : vector<4x8x8xbf16>, vector<4x8x8xbf16>, vector<4x8x8xf32> -> vector<4x8x8xf32>
    "tpu.trace_stop"() : () -> ()
    %13 = vector.shape_cast %7 : vector<8x8xf32> to vector<1x8x8xf32>
    %14 = vector.broadcast %13 : vector<1x8x8xf32> to vector<4x8x8xf32>
    %15 = arith.addf %12, %14 : vector<4x8x8xf32>
    %cst_15 = arith.constant dense<0xFF800000> : vector<4x8xf32>
    %16 = vector.multi_reduction <maximumf>, %15, %cst_15 [2] : vector<4x8x8xf32> to vector<4x8xf32>
    %17 = vector.shape_cast %16 : vector<4x8xf32> to vector<4x8x1xf32>
    %18 = vector.broadcast %17 : vector<4x8x1xf32> to vector<4x8x8xf32>
    %19 = arith.subf %15, %18 : vector<4x8x8xf32>
    %20 = math.exp %19 : vector<4x8x8xf32>
    %cst_16 = arith.constant dense<0.000000e+00> : vector<4x8xf32>
    %21 = vector.multi_reduction <add>, %20, %cst_16 [2] : vector<4x8x8xf32> to vector<4x8xf32>
    %22 = vector.shape_cast %21 : vector<4x8xf32> to vector<4x8x1xf32>
    %23 = vector.broadcast %22 : vector<4x8x1xf32> to vector<4x8x8xf32>
    %24 = arith.divf %20, %23 : vector<4x8x8xf32>
    %25 = arith.truncf %24 : vector<4x8x8xf32> to vector<4x8x8xbf16>
    %26 = arith.truncf %5 : vector<4x8x8xf32> to vector<4x8x8xbf16>
    "tpu.trace_start"() <{level = 10 : i32, message = "hqk,hkd->hqd"}> : () -> ()
    %cst_17 = arith.constant dense<0.000000e+00> : vector<4x8x8xf32>
    %27 = tpu.matmul %25, %26, %cst_17 {dimension_numbers = #tpu.dot_dimension_numbers<[2], [1], [1], [2], [0, 0, 0, 1, 1, 2], [0], [0]>} : vector<4x8x8xbf16>, vector<4x8x8xbf16>, vector<4x8x8xf32> -> vector<4x8x8xf32>
    "tpu.trace_stop"() : () -> ()
    %28 = arith.truncf %24 : vector<4x8x8xf32> to vector<4x8x8xbf16>
    %c0_18 = arith.constant 0 : index
    %c0_19 = arith.constant 0 : index
    %c0_20 = arith.constant 0 : index
    %c0_21 = arith.constant 0 : index
    %29 = vector.load %arg8[%c0_18, %c0_19, %c0_20, %c0_21] : memref<1x4x8x8xbf16, #tpu.memory_space<vmem>>, vector<1x4x8x8xbf16>
    %30 = vector.shape_cast %29 : vector<1x4x8x8xbf16> to vector<4x8x8xbf16>
    %31 = vector.shape_cast %28 : vector<4x8x8xbf16> to vector<1x4x8x8xbf16>
    tpu.vector_store %arg8[%c0_18, %c0_19, %c0_20, %c0_21], %31 {strides = array<i32>} : memref<1x4x8x8xbf16, #tpu.memory_space<vmem>>, vector<1x4x8x8xbf16>,
    %32 = vector.extract_strided_slice %27 {offsets = [0, 0, 0], sizes = [1, 8, 8], strides = [1, 1, 1]} : vector<4x8x8xf32> to vector<1x8x8xf32>
    %33 = vector.shape_cast %32 : vector<1x8x8xf32> to vector<8x8xf32>
    %c0_22 = arith.constant 0 : index
    %c0_23 = arith.constant 0 : index
    %c0_24 = arith.constant 0 : index
    %34 = vector.load %arg7[%c0_22, %c0_23, %c0_24] : memref<1x8x32xf32, #tpu.memory_space<vmem>>, vector<1x8x8xf32>
    %35 = vector.shape_cast %34 : vector<1x8x8xf32> to vector<8x8xf32>
    %36 = vector.shape_cast %33 : vector<8x8xf32> to vector<1x8x8xf32>
    tpu.vector_store %arg7[%c0_22, %c0_23, %c0_24], %36 {strides = array<i32>} : memref<1x8x32xf32, #tpu.memory_space<vmem>>, vector<1x8x8xf32>,
    %37 = vector.extract_strided_slice %27 {offsets = [1, 0, 0], sizes = [1, 8, 8], strides = [1, 1, 1]} : vector<4x8x8xf32> to vector<1x8x8xf32>
    %38 = vector.shape_cast %37 : vector<1x8x8xf32> to vector<8x8xf32>
    %c0_25 = arith.constant 0 : index
    %c0_26 = arith.constant 0 : index
    %c8 = arith.constant 8 : index
    %39 = vector.load %arg7[%c0_25, %c0_26, %c8] : memref<1x8x32xf32, #tpu.memory_space<vmem>>, vector<1x8x8xf32>
    %40 = vector.shape_cast %39 : vector<1x8x8xf32> to vector<8x8xf32>
    %41 = vector.shape_cast %38 : vector<8x8xf32> to vector<1x8x8xf32>
    tpu.vector_store %arg7[%c0_25, %c0_26, %c8], %41 {strides = array<i32>} : memref<1x8x32xf32, #tpu.memory_space<vmem>>, vector<1x8x8xf32>,
    %42 = vector.extract_strided_slice %27 {offsets = [2, 0, 0], sizes = [1, 8, 8], strides = [1, 1, 1]} : vector<4x8x8xf32> to vector<1x8x8xf32>
    %43 = vector.shape_cast %42 : vector<1x8x8xf32> to vector<8x8xf32>
    %c0_27 = arith.constant 0 : index
    %c0_28 = arith.constant 0 : index
    %c16 = arith.constant 16 : index
    %44 = vector.load %arg7[%c0_27, %c0_28, %c16] : memref<1x8x32xf32, #tpu.memory_space<vmem>>, vector<1x8x8xf32>
    %45 = vector.shape_cast %44 : vector<1x8x8xf32> to vector<8x8xf32>
    %46 = vector.shape_cast %43 : vector<8x8xf32> to vector<1x8x8xf32>
    tpu.vector_store %arg7[%c0_27, %c0_28, %c16], %46 {strides = array<i32>} : memref<1x8x32xf32, #tpu.memory_space<vmem>>, vector<1x8x8xf32>,
    %47 = vector.extract_strided_slice %27 {offsets = [3, 0, 0], sizes = [1, 8, 8], strides = [1, 1, 1]} : vector<4x8x8xf32> to vector<1x8x8xf32>
    %48 = vector.shape_cast %47 : vector<1x8x8xf32> to vector<8x8xf32>
    %c0_29 = arith.constant 0 : index
    %c0_30 = arith.constant 0 : index
    %c24 = arith.constant 24 : index
    %49 = vector.load %arg7[%c0_29, %c0_30, %c24] : memref<1x8x32xf32, #tpu.memory_space<vmem>>, vector<1x8x8xf32>
    %50 = vector.shape_cast %49 : vector<1x8x8xf32> to vector<8x8xf32>
    %51 = vector.shape_cast %48 : vector<8x8xf32> to vector<1x8x8xf32>
    tpu.vector_store %arg7[%c0_29, %c0_30, %c24], %51 {strides = array<i32>} : memref<1x8x32xf32, #tpu.memory_space<vmem>>, vector<1x8x8xf32>,
    return
  }
  func.func @transform_0(%arg0: i32, %arg1: i32, %arg2: i32) -> (i32, i32, i32, i32) {
    %c0_i32 = arith.constant 0 : i32
    %c0_i32_0 = arith.constant 0 : i32
    return %arg0, %arg1, %arg2, %c0_i32 : i32, i32, i32, i32
  }
  func.func @transform_1(%arg0: i32, %arg1: i32, %arg2: i32) -> (i32, i32, i32, i32) {
    %c0_i32 = arith.constant 0 : i32
    %c0_i32_0 = arith.constant 0 : i32
    %c0_i32_1 = arith.constant 0 : i32
    return %arg0, %arg1, %c0_i32, %c0_i32_0 : i32, i32, i32, i32
  }
  func.func @transform_2(%arg0: i32, %arg1: i32, %arg2: i32) -> (i32, i32, i32, i32) {
    %c0_i32 = arith.constant 0 : i32
    %c0_i32_0 = arith.constant 0 : i32
    %c0_i32_1 = arith.constant 0 : i32
    return %arg0, %arg1, %c0_i32, %c0_i32_0 : i32, i32, i32, i32
  }
  func.func @transform_3(%arg0: i32, %arg1: i32, %arg2: i32) -> (i32, i32, i32) {
    %c0_i32 = arith.constant 0 : i32
    %c0_i32_0 = arith.constant 0 : i32
    return %arg0, %arg2, %c0_i32 : i32, i32, i32
  }
  func.func @transform_4(%arg0: i32, %arg1: i32, %arg2: i32) -> (i32, i32, i32) {
    %c0_i32 = arith.constant 0 : i32
    return %arg0, %arg2, %arg1 : i32, i32, i32
  }
  func.func @transform_5(%arg0: i32, %arg1: i32, %arg2: i32) -> (i32, i32, i32, i32) {
    %c0_i32 = arith.constant 0 : i32
    %c0_i32_0 = arith.constant 0 : i32
    return %arg0, %arg1, %arg2, %c0_i32 : i32, i32, i32, i32
  }
}

</mosaic_0001>

<llo_original>
// kernel: scaled_dot_product_attention.1
$region0: #{scaled_dot_product_attention.1}
  #allocation0 [shape = 'u32[]', space=smem, size = 0x4, offset = 0x4, fixed_abs, tag = 'smem constant byte address 0x4 - core index']
  #allocation1 [shape = 'u32[144,128]{1,0:T(1,128)}', space=vmem, size = 0x12000, scoped, tag = 'internal scratch']
  %s0 = inlined_call_operand.hbm [shape: f32[2,4,8,8], index: 0, kind: input, shape index: {}]
  %s1 = inlined_call_operand.hbm [shape: f32[2,4,8,8], index: 1, kind: input, shape index: {}]
  %s2 = inlined_call_operand.hbm [shape: f32[2,4,8,8], index: 2, kind: input, shape index: {}]
  %s3 = inlined_call_operand.vmem [shape: f32[2,8,8], index: 3, kind: input, shape index: {}]
  %s4 = inlined_call_operand.vmem [shape: f32[2,8,32], index: 4, kind: output, shape index: {0}]
  %s5 = inlined_call_operand.hbm [shape: bf16[2,4,8,8], index: 5, kind: output, shape index: {1}]
  %6 = xla_tuple %s4, %s5
  %s7 = sld [smem:[#allocation0]]
  $region69: #{scaled_dot_product_attention.1} parent=0
    _
  %s9 = ssub.s32 1, %s7
  %s10 = scalar_select 0, %s9, %s7
  $region1: #{scaled_dot_product_attention.1} parent=0
    #allocation2 [shape = 'u8[32768]{0}', space=vmem, size = 0x8000, scoped, tag = 'input window, operand 0']
    #allocation3 [shape = 's32[2]{0}', space=sflag, size = 0x8, scoped, tag = 'scoped memory for scaled_dot_product_attention.1']
    #allocation4 [shape = 's32[2]{0}', space=sflag, size = 0x8, scoped, tag = 'scoped memory for scaled_dot_product_attention.1']
    #allocation5 [shape = 'u8[32768]{0}', space=vmem, size = 0x8000, scoped, tag = 'input window, operand 1']
    #allocation6 [shape = 's32[2]{0}', space=sflag, size = 0x8, scoped, tag = 'scoped memory for scaled_dot_product_attention.1']
    #allocation7 [shape = 'u8[32768]{0}', space=vmem, size = 0x8000, scoped, tag = 'input window, operand 2']
    #allocation8 [shape = 'u8[16384]{0}', space=vmem, size = 0x4000, scoped, tag = 'output window, operand 1']
    %11 = vsyncpa [#allocation3], 0
    %s12 = scalar_lea.sflag [#allocation3], 1
    %13 = vsyncpa %s12, 0
    %14 = vsyncpa [#allocation6], 0
    %s15 = scalar_lea.sflag [#allocation6], 1
    %16 = vsyncpa %s15, 0
    %17 = vsyncpa [#allocation4], 0
    %s18 = scalar_lea.sflag [#allocation4], 1
    %19 = vsyncpa %s18, 0
    loop: start=0, step=1, limit=4
    $region2: #{scaled_dot_product_attention.1} parent=1 // loop_pre_header
      _
    $region3: #{scaled_dot_product_attention.1} parent=1 // loop_header
      %s21 = sphi 0, %s25
      %p22 = scmp.ge.s32.totalorder %s21, 4
      %s28 = sphi 0, %s47
      %s29 = sphi 0, %s43
      %s30 = sphi 0, %s39
      %s31 = sphi 0, %s28
      %s32 = sphi 0, %s29
      %s33 = sphi 0, %s30
      %s34 = sphi 0, %s31
      %s35 = sphi 0, %s32
      %s36 = sphi 0, %s33
      %s54 = sphi 0, %s56
      %s57 = sphi 0, %s54
      %s58 = sphi 0, %s57
      %s74 = sphi 0, %s58
      %s82 = sphi 0, %s84
      %s85 = sphi 0, %s82
      %s86 = sphi 0, %s85
      %s102 = sphi 0, %s86
      %s110 = sphi 0, %s112
      %s113 = sphi 0, %s110
      %s114 = sphi 0, %s113
      %s130 = sphi 0, %s114
      %s138 = sphi 0, %s140
      %s141 = sphi 0, %s138
      %s142 = sphi 0, %s141
      %s158 = sphi 0, %s142
      %s168 = sphi 0, %s170
      %s171 = sphi 0, %s168
      %s172 = sphi 0, %s171
      %s188 = sphi 0, %s172
      %s198 = sphi 0, %s200
      %s201 = sphi 0, %s198
      %s202 = sphi 0, %s201
      %s218 = sphi 0, %s202
    $region4: #{scaled_dot_product_attention.1} parent=1 // loop_header_branch
      %24 = sbr.rel (%p22) target = $region8
    $region5: #{scaled_dot_product_attention.1} parent=1 // loop_body
      %s26 = ssub.s32 %s21, 1
      %s27 = ssub.s32 %s21, 2
      %s37 = sadd.s32 1, %s30
      %p38 = scmp.ge.s32.totalorder %s37, 1
      %s39 = scalar_select %p38, 0, %s37
      %s40 = sadd.s32 1, %s29
      %s41 = scalar_select %p38, %s40, %s29
      %p42 = scmp.ge.s32.totalorder %s41, 1
      %s43 = scalar_select %p42, 0, %s41
      %s44 = sadd.s32 1, %s28
      %s45 = scalar_select %p42, %s44, %s28
      %p46 = scmp.ge.s32.totalorder %s45, 2
      %s47 = scalar_select %p46, 0, %s45
      %s48 = ssub.s32 %s28, %s47
      %s49 = ssub.s32 %s29, %s43
      %s50 = sor.u32 %s48, %s49
      %s51 = ssub.s32 %s30, %s39
      %s52 = sor.u32 %s50, %s51
      %p53 = scmp.eq.s32.totalorder %s52, 0
      %s55 = sadd.s32 %s54, 1
      %s56 = scalar_select %p53, %s54, %s55
      %p59 = pneg %p53
      %p60 = scmp.eq.s32.totalorder %s21, 1
      %p61 = por %p59, %p60
      %p62 = scmp.ne.s32.totalorder %s54, %s57
      %p63 = scmp.eq.s32.totalorder %s21, 0
      %p64 = por %p62, %p63
      %p65 = scmp.ne.s32.totalorder %s54, %s57
      %p66 = scmp.eq.s32.totalorder %s26, 1
      %p67 = por %p65, %p66
      %p68 = scmp.ne.s32.totalorder %s57, %s58
      %p69 = scmp.eq.s32.totalorder %s26, 0
      %p70 = por %p68, %p69
      %p71 = scmp.ne.s32.totalorder %s57, %s58
      %p72 = scmp.eq.s32.totalorder %s27, 1
      %p73 = por %p71, %p72
      %p75 = scmp.ne.s32.totalorder %s58, %s74
      %p76 = scmp.eq.s32.totalorder %s27, 0
      %p77 = por %p75, %p76
      %s78 = ssub.s32 %s28, %s47
      %s79 = ssub.s32 %s29, %s43
      %s80 = sor.u32 %s78, %s79
      %p81 = scmp.eq.s32.totalorder %s80, 0
      %s83 = sadd.s32 %s82, 1
      %s84 = scalar_select %p81, %s82, %s83
      %p87 = pneg %p81
      %p88 = scmp.eq.s32.totalorder %s21, 1
      %p89 = por %p87, %p88
      %p90 = scmp.ne.s32.totalorder %s82, %s85
      %p91 = scmp.eq.s32.totalorder %s21, 0
      %p92 = por %p90, %p91
      %p93 = scmp.ne.s32.totalorder %s82, %s85
      %p94 = scmp.eq.s32.totalorder %s26, 1
      %p95 = por %p93, %p94
      %p96 = scmp.ne.s32.totalorder %s85, %s86
      %p97 = scmp.eq.s32.totalorder %s26, 0
      %p98 = por %p96, %p97
      %p99 = scmp.ne.s32.totalorder %s85, %s86
      %p100 = scmp.eq.s32.totalorder %s27, 1
      %p101 = por %p99, %p100
      %p103 = scmp.ne.s32.totalorder %s86, %s102
      %p104 = scmp.eq.s32.totalorder %s27, 0
      %p105 = por %p103, %p104
      %s106 = ssub.s32 %s28, %s47
      %s107 = ssub.s32 %s29, %s43
      %s108 = sor.u32 %s106, %s107
      %p109 = scmp.eq.s32.totalorder %s108, 0
      %s111 = sadd.s32 %s110, 1
      %s112 = scalar_select %p109, %s110, %s111
      %p115 = pneg %p109
      %p116 = scmp.eq.s32.totalorder %s21, 1
      %p117 = por %p115, %p116
      %p118 = scmp.ne.s32.totalorder %s110, %s113
      %p119 = scmp.eq.s32.totalorder %s21, 0
      %p120 = por %p118, %p119
      %p121 = scmp.ne.s32.totalorder %s110, %s113
      %p122 = scmp.eq.s32.totalorder %s26, 1
      %p123 = por %p121, %p122
      %p124 = scmp.ne.s32.totalorder %s113, %s114
      %p125 = scmp.eq.s32.totalorder %s26, 0
      %p126 = por %p124, %p125
      %p127 = scmp.ne.s32.totalorder %s113, %s114
      %p128 = scmp.eq.s32.totalorder %s27, 1
      %p129 = por %p127, %p128
      %p131 = scmp.ne.s32.totalorder %s114, %s130
      %p132 = scmp.eq.s32.totalorder %s27, 0
      %p133 = por %p131, %p132
      %s134 = ssub.s32 %s28, %s47
      %s135 = ssub.s32 %s30, %s39
      %s136 = sor.u32 %s134, %s135
      %p137 = scmp.eq.s32.totalorder %s136, 0
      %s139 = sadd.s32 %s138, 1
      %s140 = scalar_select %p137, %s138, %s139
      %p143 = pneg %p137
      %p144 = scmp.eq.s32.totalorder %s21, 1
      %p145 = por %p143, %p144
      %p146 = scmp.ne.s32.totalorder %s138, %s141
      %p147 = scmp.eq.s32.totalorder %s21, 0
      %p148 = por %p146, %p147
      %p149 = scmp.ne.s32.totalorder %s138, %s141
      %p150 = scmp.eq.s32.totalorder %s26, 1
      %p151 = por %p149, %p150
      %p152 = scmp.ne.s32.totalorder %s141, %s142
      %p153 = scmp.eq.s32.totalorder %s26, 0
      %p154 = por %p152, %p153
      %p155 = scmp.ne.s32.totalorder %s141, %s142
      %p156 = scmp.eq.s32.totalorder %s27, 1
      %p157 = por %p155, %p156
      %p159 = scmp.ne.s32.totalorder %s142, %s158
      %p160 = scmp.eq.s32.totalorder %s27, 0
      %p161 = por %p159, %p160
      %s162 = ssub.s32 %s28, %s47
      %s163 = ssub.s32 %s30, %s39
      %s164 = sor.u32 %s162, %s163
      %s165 = ssub.s32 %s29, %s43
      %s166 = sor.u32 %s164, %s165
      %p167 = scmp.eq.s32.totalorder %s166, 0
      %s169 = sadd.s32 %s168, 1
      %s170 = scalar_select %p167, %s168, %s169
      %p173 = pneg %p167
      %p174 = scmp.eq.s32.totalorder %s21, 1
      %p175 = por %p173, %p174
      %p176 = scmp.ne.s32.totalorder %s168, %s171
      %p177 = scmp.eq.s32.totalorder %s21, 0
      %p178 = por %p176, %p177
      %p179 = scmp.ne.s32.totalorder %s168, %s171
      %p180 = scmp.eq.s32.totalorder %s26, 1
      %p181 = por %p179, %p180
      %p182 = scmp.ne.s32.totalorder %s171, %s172
      %p183 = scmp.eq.s32.totalorder %s26, 0
      %p184 = por %p182, %p183
      %p185 = scmp.ne.s32.totalorder %s171, %s172
      %p186 = scmp.eq.s32.totalorder %s27, 1
      %p187 = por %p185, %p186
      %p189 = scmp.ne.s32.totalorder %s172, %s188
      %p190 = scmp.eq.s32.totalorder %s27, 0
      %p191 = por %p189, %p190
      %s192 = ssub.s32 %s28, %s47
      %s193 = ssub.s32 %s29, %s43
      %s194 = sor.u32 %s192, %s193
      %s195 = ssub.s32 %s30, %s39
      %s196 = sor.u32 %s194, %s195
      %p197 = scmp.eq.s32.totalorder %s196, 0
      %s199 = sadd.s32 %s198, 1
      %s200 = scalar_select %p197, %s198, %s199
      %p203 = pneg %p197
      %p204 = scmp.eq.s32.totalorder %s21, 1
      %p205 = por %p203, %p204
      %p206 = scmp.ne.s32.totalorder %s198, %s201
      %p207 = scmp.eq.s32.totalorder %s21, 0
      %p208 = por %p206, %p207
      %p209 = scmp.ne.s32.totalorder %s198, %s201
      %p210 = scmp.eq.s32.totalorder %s26, 1
      %p211 = por %p209, %p210
      %p212 = scmp.ne.s32.totalorder %s201, %s202
      %p213 = scmp.eq.s32.totalorder %s26, 0
      %p214 = por %p212, %p213
      %p215 = scmp.ne.s32.totalorder %s201, %s202
      %p216 = scmp.eq.s32.totalorder %s27, 1
      %p217 = por %p215, %p216
      %p219 = scmp.ne.s32.totalorder %s202, %s218
      %p220 = scmp.eq.s32.totalorder %s27, 0
      %p221 = por %p219, %p220
      %p222 = scmp.le.s32.totalorder 1, %s21
      %p223 = scmp.lt.s32.totalorder %s21, 3
      %p224 = pnand %p222, %p223
      %p225 = pneg %p224
      // Predicated region
      $region9: #{scaled_dot_product_attention.1} parent=5 // pred_check
        _
      $region10: #{scaled_dot_product_attention.1} parent=5 // pred_check_branch
        %227 = sbr.rel (%p224) target = $region12
      $region11: #{scaled_dot_product_attention.1} parent=5 // pred_region
        %s228 = ssub.s32 %s21, 1
      $region12: #{scaled_dot_product_attention.1} parent=5 // pred_fallthru
        _
      %p229 = scmp.lt.s32.totalorder %s21, 2
      // Predicated region
      $region13: #{scaled_dot_product_attention.1} parent=5 // pred_check
        %p230 = pneg %p229
      $region14: #{scaled_dot_product_attention.1} parent=5 // pred_check_branch
        %232 = sbr.rel (%p230) target = $region16
      $region15: #{scaled_dot_product_attention.1} parent=5 // pred_region
        // Predicated region
        $region17: #{scaled_dot_product_attention.1} parent=15 // pred_check
          %p233 = pneg %p64
        $region18: #{scaled_dot_product_attention.1} parent=15 // pred_check_branch
          %235 = sbr.rel (%p233) target = $region20
        $region19: #{scaled_dot_product_attention.1} parent=15 // pred_region
          %s236 = sand.u32 %s54, 1
          %s237 = scalar_lea.sflag [#allocation3], %s236
          %s238 = sand.u32 %s54, 1
          %s239 = smul.addr %s238, 32
          %s240 = scalar_lea.vmem [#allocation2], %s239
          %s241 = smul.u32 4, %s29
          %s243 = ssub.s32 512, 512
          %244 = vsyncadd %s237, %s243
          %s245 = sadd.s32 %s30, %s241
          %s246 = smul.addr %s28, 4
          %s247 = sadd.s32 %s245, %s246
          %s248 = smul.addr %s247, 128
          %s249 = scalar_lea.hbm %s0, %s248
          %s250 = sshll.u32 %s240, 4
          %s251 = int_to_ptr.vmem [resolvable:$true] %s250
          %256 = dma.hbm_to_vmem [thread:$0]  %s249, 512, %s251, %s237, 128, 128, 8
        $region20: #{scaled_dot_product_attention.1} parent=15 // pred_fallthru
          _
        // Predicated region
        $region21: #{scaled_dot_product_attention.1} parent=15 // pred_check
          %p257 = pneg %p92
        $region22: #{scaled_dot_product_attention.1} parent=15 // pred_check_branch
          %259 = sbr.rel (%p257) target = $region24
        $region23: #{scaled_dot_product_attention.1} parent=15 // pred_region
          %s260 = sand.u32 %s21, 1
          %s261 = scalar_lea.sflag [#allocation6], %s260
          %s262 = sand.u32 %s82, 1
          %s263 = smul.addr %s262, 32
          %s264 = scalar_lea.vmem [#allocation5], %s263
          %s265 = smul.u32 4, %s29
          %s267 = ssub.s32 512, 512
          %268 = vsyncadd %s261, %s267
          %s269 = smul.addr %s28, 4
          %s270 = sadd.s32 %s265, %s269
          %s271 = smul.addr %s270, 128
          %s272 = scalar_lea.hbm %s1, %s271
          %s273 = sshll.u32 %s264, 4
          %s274 = int_to_ptr.vmem [resolvable:$true] %s273
          %279 = dma.hbm_to_vmem [thread:$0]  %s272, 512, %s274, %s261, 128, 128, 8
        $region24: #{scaled_dot_product_attention.1} parent=15 // pred_fallthru
          _
        // Predicated region
        $region25: #{scaled_dot_product_attention.1} parent=15 // pred_check
          %p280 = pneg %p120
        $region26: #{scaled_dot_product_attention.1} parent=15 // pred_check_branch
          %282 = sbr.rel (%p280) target = $region28
        $region27: #{scaled_dot_product_attention.1} parent=15 // pred_region
          %s283 = sand.u32 %s21, 1
          %s284 = scalar_lea.sflag [#allocation6], %s283
          %s285 = sand.u32 %s110, 1
          %s286 = smul.addr %s285, 32
          %s287 = scalar_lea.vmem [#allocation7], %s286
          %s288 = smul.u32 4, %s29
          %s290 = ssub.s32 512, 512
          %291 = vsyncadd %s284, %s290
          %s292 = smul.addr %s28, 4
          %s293 = sadd.s32 %s288, %s292
          %s294 = smul.addr %s293, 128
          %s295 = scalar_lea.hbm %s2, %s294
          %s296 = sshll.u32 %s287, 4
          %s297 = int_to_ptr.vmem [resolvable:$true] %s296
          %302 = dma.hbm_to_vmem [thread:$0]  %s295, 512, %s297, %s284, 128, 128, 8
        $region28: #{scaled_dot_product_attention.1} parent=15 // pred_fallthru
          _
        // Predicated region
        $region29: #{scaled_dot_product_attention.1} parent=15 // pred_check
          %p303 = pneg %p148
        $region30: #{scaled_dot_product_attention.1} parent=15 // pred_check_branch
          %305 = sbr.rel (%p303) target = $region32
        $region31: #{scaled_dot_product_attention.1} parent=15 // pred_region
          %p306 = scmp.lt.s32.totalorder %s28, 1
          %s307 = scalar_select %p306, %s28, 1
          %p308 = scmp.lt.s32.totalorder %s30, 0
          %s309 = scalar_select %p308, %s30, 0
          %s310 = sadd.s32 %s309, %s307
          %s311 = smul.addr %s310, 8
          %s312 = scalar_lea.vmem %s3, %s311
        $region32: #{scaled_dot_product_attention.1} parent=15 // pred_fallthru
          _
      $region16: #{scaled_dot_product_attention.1} parent=5 // pred_fallthru
        _
      %p313 = scmp.le.s32.totalorder 1, %s21
      %p314 = scmp.lt.s32.totalorder %s21, 3
      %p315 = pnand %p313, %p314
      %p316 = pneg %p315
      // Predicated region
      $region33: #{scaled_dot_product_attention.1} parent=5 // pred_check
        _
      $region34: #{scaled_dot_product_attention.1} parent=5 // pred_check_branch
        %318 = sbr.rel (%p315) target = $region36
      $region35: #{scaled_dot_product_attention.1} parent=5 // pred_region
        %s319 = ssub.s32 %s21, 1
        %s320 = sand.u32 %s57, 1
        %s321 = scalar_lea.sflag [#allocation3], %s320
        %s322 = sand.u32 %s57, 1
        %s323 = smul.addr %s322, 32
        %s324 = scalar_lea.vmem [#allocation2], %s323
        // Predicated region
        $region37: #{scaled_dot_product_attention.1} parent=35 // pred_check
          %p325 = pneg %p70
        $region38: #{scaled_dot_product_attention.1} parent=35 // pred_check_branch
          %327 = sbr.rel (%p325) target = $region40
        $region39: #{scaled_dot_product_attention.1} parent=35 // pred_region
          %328 = dma.done %s321, 512
        $region40: #{scaled_dot_product_attention.1} parent=35 // pred_fallthru
          _
        %s329 = sand.u32 %s26, 1
        %s330 = scalar_lea.sflag [#allocation6], %s329
        %s331 = sand.u32 %s85, 1
        %s332 = smul.addr %s331, 32
        %s333 = scalar_lea.vmem [#allocation5], %s332
        // Predicated region
        $region41: #{scaled_dot_product_attention.1} parent=35 // pred_check
          %p334 = pneg %p98
        $region42: #{scaled_dot_product_attention.1} parent=35 // pred_check_branch
          %336 = sbr.rel (%p334) target = $region44
        $region43: #{scaled_dot_product_attention.1} parent=35 // pred_region
          %337 = dma.done %s330, 512
        $region44: #{scaled_dot_product_attention.1} parent=35 // pred_fallthru
          _
        %s338 = sand.u32 %s26, 1
        %s339 = scalar_lea.sflag [#allocation6], %s338
        %s340 = sand.u32 %s113, 1
        %s341 = smul.addr %s340, 32
        %s342 = scalar_lea.vmem [#allocation7], %s341
        // Predicated region
        $region45: #{scaled_dot_product_attention.1} parent=35 // pred_check
          %p343 = pneg %p126
        $region46: #{scaled_dot_product_attention.1} parent=35 // pred_check_branch
          %345 = sbr.rel (%p343) target = $region48
        $region47: #{scaled_dot_product_attention.1} parent=35 // pred_region
          %346 = dma.done %s339, 512
        $region48: #{scaled_dot_product_attention.1} parent=35 // pred_fallthru
          _
        %s347 = sand.u32 %s57, 1
        %s348 = scalar_lea.sflag [#allocation3], %s347
        %s349 = sand.u32 %s57, 1
        %s350 = smul.addr %s349, 32
        %s351 = scalar_lea.vmem [#allocation2], %s350
        %p352 = pneg %p70
        %p353 = pneg %p67
        %s354 = sand.u32 %s26, 1
        %s355 = scalar_lea.sflag [#allocation6], %s354
        %s356 = sand.u32 %s85, 1
        %s357 = smul.addr %s356, 32
        %s358 = scalar_lea.vmem [#allocation5], %s357
        %p359 = pneg %p98
        %p360 = pneg %p95
        %s361 = sand.u32 %s26, 1
        %s362 = scalar_lea.sflag [#allocation6], %s361
        %s363 = sand.u32 %s113, 1
        %s364 = smul.addr %s363, 32
        %s365 = scalar_lea.vmem [#allocation7], %s364
        %p366 = pneg %p126
        %p367 = pneg %p123
        %p368 = scmp.lt.s32.totalorder %s31, 1
        %s369 = scalar_select %p368, %s31, 1
        %p370 = scmp.lt.s32.totalorder %s33, 0
        %s371 = scalar_select %p370, %s33, 0
        %s372 = sadd.s32 %s371, %s369
        %s373 = smul.addr %s372, 8
        %s374 = scalar_lea.vmem %s3, %s373
        %p375 = pneg %p154
        %p376 = pneg %p151
        %p377 = pneg %p184
        %p378 = pneg %p181
        %p379 = scmp.lt.s32.totalorder %s31, 1
        %s380 = scalar_select %p379, %s31, 1
        %p381 = scmp.lt.s32.totalorder %s33, 0
        %s382 = scalar_select %p381, %s33, 0
        %p383 = scmp.lt.s32.totalorder %s32, 0
        %s384 = scalar_select %p383, %s32, 0
        %s385 = sadd.s32 %s384, %s382
        %s386 = sadd.s32 %s385, %s380
        %s387 = smul.addr %s386, 8
        %s388 = scalar_lea.vmem %s4, %s387
        %p389 = pneg %p214
        %p390 = pneg %p211
        %s391 = sand.u32 %s201, 1
        %s392 = scalar_lea.sflag [#allocation4], %s391
        %s393 = sand.u32 %s201, 1
        %s394 = smul.addr %s393, 16
        %s395 = scalar_lea.vmem [#allocation8], %s394
        %s396 = smul.u32 4, %s32
        %s397 = smul.u32 4, %s32
        %s398 = smul.u32 4, %s32
        %p399 = scmp.lt.s32.totalorder %s31, 1
        %s400 = scalar_select %p399, %s31, 1
        %p401 = scmp.lt.s32.totalorder %s33, 0
        %s402 = scalar_select %p401, %s33, 0
        %s403 = sadd.s32 %s402, %s400
        %s404 = smul.addr %s403, 8
        %s405 = scalar_lea.vmem %s3, %s404
        %p406 = scmp.lt.s32.totalorder %s31, 1
        %s407 = scalar_select %p406, %s31, 1
        %p408 = scmp.lt.s32.totalorder %s33, 0
        %s409 = scalar_select %p408, %s33, 0
        %p410 = scmp.lt.s32.totalorder %s32, 0
        %s411 = scalar_select %p410, %s32, 0
        %s412 = sadd.s32 %s411, %s409
        %s413 = sadd.s32 %s412, %s407
        %s414 = smul.addr %s413, 8
        %s415 = scalar_lea.vmem %s4, %s414
        %s416 = smul.u32 4, %s32
        %v418 = vld [vmem:[%s324] sm:$0xff]
        %v419 = vld [vmem:[%s324 + $0x8] sm:$0xff]
        %v420 = vld [vmem:[%s324 + $0x10] sm:$0xff]
        %v421 = vld [vmem:[%s324 + $0x18] sm:$0xff]
        %v422 = vld [vmem:[%s333] sm:$0xff]
        %v423 = vld [vmem:[%s333 + $0x8] sm:$0xff]
        %v424 = vld [vmem:[%s333 + $0x10] sm:$0xff]
        %v425 = vld [vmem:[%s333 + $0x18] sm:$0xff]
        %v426 = vld [vmem:[%s342] sm:$0xff]
        %v427 = vld [vmem:[%s342 + $0x8] sm:$0xff]
        %v428 = vld [vmem:[%s342 + $0x10] sm:$0xff]
        %v429 = vld [vmem:[%s342 + $0x18] sm:$0xff]
        %v430 = vld [vmem:[%s405] sm:$0xff]
        %v431 = vmul.f32 %v418, 0.35355338
        %v432 = vmul.f32 %v419, 0.35355338
        %v433 = vmul.f32 %v420, 0.35355338
        %v434 = vmul.f32 %v421, 0.35355338
        %v435 = vpack.c.bf16 %v431, %v431
        %v436 = vpack.c.bf16 %v432, %v432
        %v437 = vpack.c.bf16 %v433, %v433
        %v438 = vpack.c.bf16 %v434, %v434
        %v439 = vpack.c.bf16 %v422, %v422
        %v440 = vpack.c.bf16 %v423, %v423
        %v441 = vpack.c.bf16 %v424, %v424
        %v442 = vpack.c.bf16 %v425, %v425
        %vm443 = vcmask 64512
        %v445 = vsel %vm443, %v435, 0
        %v448 = vsel %vm443, %v439, 0
        %450 = vmatprep.subr.bf16.mxu0 0
        %451 = vmatpush1.bf16.xpose.msra.mxu0 %v448
        %452 = vmatprep.subr.bf16.mxu0 0
        %453 = vmatpush1.bf16.xpose.msra.mxu0 0
        %454 = vmatprep.subr.bf16.mxu0 0
        %455 = vmatpush1.bf16.xpose.msra.mxu0 0
        %456 = vmatprep.subr.bf16.mxu0 0
        %457 = vmatpush1.bf16.xpose.msra.mxu0 0
        %458 = vmatprep.subr.bf16.mxu0 0
        %459 = vmatpush1.bf16.xpose.msra.mxu0 0
        %460 = vmatprep.subr.bf16.mxu0 0
        %461 = vmatpush1.bf16.xpose.msra.mxu0 0
        %462 = vmatprep.subr.bf16.mxu0 0
        %463 = vmatpush1.bf16.xpose.msra.mxu0 0
        %464 = vmatprep.subr.bf16.mxu0 0
        %465 = vmatpush1.bf16.xpose.msra.mxu0 0
        %466 = vmatprep.subr.bf16.mxu0 0
        %467 = vmatpush1.bf16.xpose.msra.mxu0 0
        %468 = vmatprep.subr.bf16.mxu0 0
        %469 = vmatpush1.bf16.xpose.msra.mxu0 0
        %470 = vmatprep.subr.bf16.mxu0 0
        %471 = vmatpush1.bf16.xpose.msra.mxu0 0
        %472 = vmatprep.subr.bf16.mxu0 0
        %473 = vmatpush1.bf16.xpose.msra.mxu0 0
        %474 = vmatprep.subr.bf16.mxu0 0
        %475 = vmatpush1.bf16.xpose.msra.mxu0 0
        %476 = vmatprep.subr.bf16.mxu0 0
        %477 = vmatpush1.bf16.xpose.msra.mxu0 0
        %478 = vmatprep.subr.bf16.mxu0 0
        %479 = vmatpush1.bf16.xpose.msra.mxu0 0
        %480 = vmatprep.subr.bf16.mxu0 0
        %481 = vmatpush1.bf16.xpose.msra.mxu0 0
        %482 = vmatprep.mubr.bf16.mxu0 0
        %483 = vmatmul.mubr.bf16.gmra.mrb[0].mxu0 %v445
        %v484 = vpop.f32.mrb[0].mxu0
        %v485 = vadd.f32 %v430, %v484
        %v486 = vpop.f32.mrb[0].mxu0
        %v487 = vpop.f32.mrb[0].mxu0
        %v488 = vpop.f32.mrb[0].mxu0
        %489 = vdwg.mxu0
        %v491 = vsel %vm443, %v436, 0
        %v494 = vsel %vm443, %v440, 0
        %496 = vmatprep.subr.bf16.mxu0 0
        %497 = vmatpush1.bf16.xpose.msra.mxu0 %v494
        %498 = vmatprep.subr.bf16.mxu0 0
        %499 = vmatpush1.bf16.xpose.msra.mxu0 0
        %500 = vmatprep.subr.bf16.mxu0 0
        %501 = vmatpush1.bf16.xpose.msra.mxu0 0
        %502 = vmatprep.subr.bf16.mxu0 0
        %503 = vmatpush1.bf16.xpose.msra.mxu0 0
        %504 = vmatprep.subr.bf16.mxu0 0
        %505 = vmatpush1.bf16.xpose.msra.mxu0 0
        %506 = vmatprep.subr.bf16.mxu0 0
        %507 = vmatpush1.bf16.xpose.msra.mxu0 0
        %508 = vmatprep.subr.bf16.mxu0 0
        %509 = vmatpush1.bf16.xpose.msra.mxu0 0
        %510 = vmatprep.subr.bf16.mxu0 0
        %511 = vmatpush1.bf16.xpose.msra.mxu0 0
        %512 = vmatprep.subr.bf16.mxu0 0
        %513 = vmatpush1.bf16.xpose.msra.mxu0 0
        %514 = vmatprep.subr.bf16.mxu0 0
        %515 = vmatpush1.bf16.xpose.msra.mxu0 0
        %516 = vmatprep.subr.bf16.mxu0 0
        %517 = vmatpush1.bf16.xpose.msra.mxu0 0
        %518 = vmatprep.subr.bf16.mxu0 0
        %519 = vmatpush1.bf16.xpose.msra.mxu0 0
        %520 = vmatprep.subr.bf16.mxu0 0
        %521 = vmatpush1.bf16.xpose.msra.mxu0 0
        %522 = vmatprep.subr.bf16.mxu0 0
        %523 = vmatpush1.bf16.xpose.msra.mxu0 0
        %524 = vmatprep.subr.bf16.mxu0 0
        %525 = vmatpush1.bf16.xpose.msra.mxu0 0
        %526 = vmatprep.subr.bf16.mxu0 0
        %527 = vmatpush1.bf16.xpose.msra.mxu0 0
        %528 = vmatprep.mubr.bf16.mxu0 0
        %529 = vmatmul.mubr.bf16.gmra.mrb[0].mxu0 %v491
        %v530 = vpop.f32.mrb[0].mxu0
        %v531 = vadd.f32 %v430, %v530
        %v532 = vpop.f32.mrb[0].mxu0
        %v533 = vpop.f32.mrb[0].mxu0
        %v534 = vpop.f32.mrb[0].mxu0
        %535 = vdwg.mxu0
        %v537 = vsel %vm443, %v437, 0
        %v540 = vsel %vm443, %v441, 0
        %542 = vmatprep.subr.bf16.mxu0 0
        %543 = vmatpush1.bf16.xpose.msra.mxu0 %v540
        %544 = vmatprep.subr.bf16.mxu0 0
        %545 = vmatpush1.bf16.xpose.msra.mxu0 0
        %546 = vmatprep.subr.bf16.mxu0 0
        %547 = vmatpush1.bf16.xpose.msra.mxu0 0
        %548 = vmatprep.subr.bf16.mxu0 0
        %549 = vmatpush1.bf16.xpose.msra.mxu0 0
        %550 = vmatprep.subr.bf16.mxu0 0
        %551 = vmatpush1.bf16.xpose.msra.mxu0 0
        %552 = vmatprep.subr.bf16.mxu0 0
        %553 = vmatpush1.bf16.xpose.msra.mxu0 0
        %554 = vmatprep.subr.bf16.mxu0 0
        %555 = vmatpush1.bf16.xpose.msra.mxu0 0
        %556 = vmatprep.subr.bf16.mxu0 0
        %557 = vmatpush1.bf16.xpose.msra.mxu0 0
        %558 = vmatprep.subr.bf16.mxu0 0
        %559 = vmatpush1.bf16.xpose.msra.mxu0 0
        %560 = vmatprep.subr.bf16.mxu0 0
        %561 = vmatpush1.bf16.xpose.msra.mxu0 0
        %562 = vmatprep.subr.bf16.mxu0 0
        %563 = vmatpush1.bf16.xpose.msra.mxu0 0
        %564 = vmatprep.subr.bf16.mxu0 0
        %565 = vmatpush1.bf16.xpose.msra.mxu0 0
        %566 = vmatprep.subr.bf16.mxu0 0
        %567 = vmatpush1.bf16.xpose.msra.mxu0 0
        %568 = vmatprep.subr.bf16.mxu0 0
        %569 = vmatpush1.bf16.xpose.msra.mxu0 0
        %570 = vmatprep.subr.bf16.mxu0 0
        %571 = vmatpush1.bf16.xpose.msra.mxu0 0
        %572 = vmatprep.subr.bf16.mxu0 0
        %573 = vmatpush1.bf16.xpose.msra.mxu0 0
        %574 = vmatprep.mubr.bf16.mxu0 0
        %575 = vmatmul.mubr.bf16.gmra.mrb[0].mxu0 %v537
        %v576 = vpop.f32.mrb[0].mxu0
        %v577 = vadd.f32 %v430, %v576
        %v578 = vpop.f32.mrb[0].mxu0
        %v579 = vpop.f32.mrb[0].mxu0
        %v580 = vpop.f32.mrb[0].mxu0
        %581 = vdwg.mxu0
        %v583 = vsel %vm443, %v438, 0
        %v586 = vsel %vm443, %v442, 0
        %588 = vmatprep.subr.bf16.mxu0 0
        %589 = vmatpush1.bf16.xpose.msra.mxu0 %v586
        %590 = vmatprep.subr.bf16.mxu0 0
        %591 = vmatpush1.bf16.xpose.msra.mxu0 0
        %592 = vmatprep.subr.bf16.mxu0 0
        %593 = vmatpush1.bf16.xpose.msra.mxu0 0
        %594 = vmatprep.subr.bf16.mxu0 0
        %595 = vmatpush1.bf16.xpose.msra.mxu0 0
        %596 = vmatprep.subr.bf16.mxu0 0
        %597 = vmatpush1.bf16.xpose.msra.mxu0 0
        %598 = vmatprep.subr.bf16.mxu0 0
        %599 = vmatpush1.bf16.xpose.msra.mxu0 0
        %600 = vmatprep.subr.bf16.mxu0 0
        %601 = vmatpush1.bf16.xpose.msra.mxu0 0
        %602 = vmatprep.subr.bf16.mxu0 0
        %603 = vmatpush1.bf16.xpose.msra.mxu0 0
        %604 = vmatprep.subr.bf16.mxu0 0
        %605 = vmatpush1.bf16.xpose.msra.mxu0 0
        %606 = vmatprep.subr.bf16.mxu0 0
        %607 = vmatpush1.bf16.xpose.msra.mxu0 0
        %608 = vmatprep.subr.bf16.mxu0 0
        %609 = vmatpush1.bf16.xpose.msra.mxu0 0
        %610 = vmatprep.subr.bf16.mxu0 0
        %611 = vmatpush1.bf16.xpose.msra.mxu0 0
        %612 = vmatprep.subr.bf16.mxu0 0
        %613 = vmatpush1.bf16.xpose.msra.mxu0 0
        %614 = vmatprep.subr.bf16.mxu0 0
        %615 = vmatpush1.bf16.xpose.msra.mxu0 0
        %616 = vmatprep.subr.bf16.mxu0 0
        %617 = vmatpush1.bf16.xpose.msra.mxu0 0
        %618 = vmatprep.subr.bf16.mxu0 0
        %619 = vmatpush1.bf16.xpose.msra.mxu0 0
        %620 = vmatprep.mubr.bf16.mxu0 0
        %621 = vmatmul.mubr.bf16.gmra.mrb[0].mxu0 %v583
        %v622 = vpop.f32.mrb[0].mxu0
        %v623 = vadd.f32 %v430, %v622
        %v624 = vpop.f32.mrb[0].mxu0
        %v625 = vpop.f32.mrb[0].mxu0
        %v626 = vpop.f32.mrb[0].mxu0
        %627 = vdwg.mxu0
        %v628 = vsel %vm443, %v485, -inf
        %629 = vmax.xlane.f32.xlu0 %v628
        %v630 = vpop.xlane.xlu0 %629
        %v631 = vsel %vm443, %v531, -inf
        %632 = vmax.xlane.f32.xlu0 %v631
        %v633 = vpop.xlane.xlu0 %632
        %v634 = vsel %vm443, %v577, -inf
        %635 = vmax.xlane.f32.xlu0 %v634
        %v636 = vpop.xlane.xlu0 %635
        %v637 = vsel %vm443, %v623, -inf
        %638 = vmax.xlane.f32.xlu0 %v637
        %v639 = vpop.xlane.xlu0 %638
        %v640 = vsub.f32 %v485, %v630
        %v641 = vsub.f32 %v531, %v633
        %v642 = vsub.f32 %v577, %v636
        %v643 = vsub.f32 %v623, %v639
        %v644 = vmul.f32 %v640, 1.442695
        %v645 = vpow.pop %v644
        %v646 = vmul.f32 %v641, 1.442695
        %v647 = vpow.pop %v646
        %v648 = vmul.f32 %v642, 1.442695
        %v649 = vpow.pop %v648
        %v650 = vmul.f32 %v643, 1.442695
        %v651 = vpow.pop %v650
        %v652 = vsel %vm443, %v645, 0.0
        %653 = vadd.xlane.f32.xlu0 %v652
        %v654 = vpop.xlane.xlu0 %653
        %v655 = vsel %vm443, %v647, 0.0
        %656 = vadd.xlane.f32.xlu0 %v655
        %v657 = vpop.xlane.xlu0 %656
        %v658 = vsel %vm443, %v649, 0.0
        %659 = vadd.xlane.f32.xlu0 %v658
        %v660 = vpop.xlane.xlu0 %659
        %v661 = vsel %vm443, %v651, 0.0
        %662 = vadd.xlane.f32.xlu0 %v661
        %v663 = vpop.xlane.xlu0 %662
        %v664 = vrcp.pop %v654
        %v665 = vmul.f32 %v645, %v664
        %v666 = vrcp.pop %v657
        %v667 = vmul.f32 %v647, %v666
        %v668 = vrcp.pop %v660
        %v669 = vmul.f32 %v649, %v668
        %v670 = vrcp.pop %v663
        %v671 = vmul.f32 %v651, %v670
        %v672 = vpack.c.bf16 %v665, %v665
        %v673 = vpack.c.bf16 %v667, %v667
        %v674 = vpack.c.bf16 %v669, %v669
        %v675 = vpack.c.bf16 %v671, %v671
        %v676 = vpack.c.bf16 %v426, %v426
        %v677 = vpack.c.bf16 %v427, %v427
        %v678 = vpack.c.bf16 %v428, %v428
        %v679 = vpack.c.bf16 %v429, %v429
        %v681 = vsel %vm443, %v672, 0
        %vm683 = vcmask 1043456
        %v685 = vsel %vm683, %v676, 0
        %687 = vmatprep.subr.bf16.mxu0 0
        %688 = vmatpush1.bf16.msra.mxu0 %v685
        %689 = vmatprep.subr.bf16.mxu0 0
        %690 = vmatpush1.bf16.msra.mxu0 0
        %691 = vmatprep.subr.bf16.mxu0 0
        %692 = vmatpush1.bf16.msra.mxu0 0
        %693 = vmatprep.subr.bf16.mxu0 0
        %694 = vmatpush1.bf16.msra.mxu0 0
        %695 = vmatprep.subr.bf16.mxu0 0
        %696 = vmatpush1.bf16.msra.mxu0 0
        %697 = vmatprep.subr.bf16.mxu0 0
        %698 = vmatpush1.bf16.msra.mxu0 0
        %699 = vmatprep.subr.bf16.mxu0 0
        %700 = vmatpush1.bf16.msra.mxu0 0
        %701 = vmatprep.subr.bf16.mxu0 0
        %702 = vmatpush1.bf16.msra.mxu0 0
        %703 = vmatprep.subr.bf16.mxu0 0
        %704 = vmatpush1.bf16.msra.mxu0 0
        %705 = vmatprep.subr.bf16.mxu0 0
        %706 = vmatpush1.bf16.msra.mxu0 0
        %707 = vmatprep.subr.bf16.mxu0 0
        %708 = vmatpush1.bf16.msra.mxu0 0
        %709 = vmatprep.subr.bf16.mxu0 0
        %710 = vmatpush1.bf16.msra.mxu0 0
        %711 = vmatprep.subr.bf16.mxu0 0
        %712 = vmatpush1.bf16.msra.mxu0 0
        %713 = vmatprep.subr.bf16.mxu0 0
        %714 = vmatpush1.bf16.msra.mxu0 0
        %715 = vmatprep.subr.bf16.mxu0 0
        %716 = vmatpush1.bf16.msra.mxu0 0
        %717 = vmatprep.subr.bf16.mxu0 0
        %718 = vmatpush1.bf16.msra.mxu0 0
        %719 = vmatprep.mubr.bf16.mxu0 0
        %720 = vmatmul.mubr.bf16.gmra.mrb[0].mxu0 %v681
        %v721 = vpop.f32.mrb[0].mxu0
        %v722 = vadd.f32 0.0, %v721
        %v723 = vpop.f32.mrb[0].mxu0
        %v724 = vpop.f32.mrb[0].mxu0
        %v725 = vpop.f32.mrb[0].mxu0
        %726 = vdwg.mxu0
        %v728 = vsel %vm443, %v673, 0
        %v731 = vsel %vm683, %v677, 0
        %733 = vmatprep.subr.bf16.mxu0 0
        %734 = vmatpush1.bf16.msra.mxu0 %v731
        %735 = vmatprep.subr.bf16.mxu0 0
        %736 = vmatpush1.bf16.msra.mxu0 0
        %737 = vmatprep.subr.bf16.mxu0 0
        %738 = vmatpush1.bf16.msra.mxu0 0
        %739 = vmatprep.subr.bf16.mxu0 0
        %740 = vmatpush1.bf16.msra.mxu0 0
        %741 = vmatprep.subr.bf16.mxu0 0
        %742 = vmatpush1.bf16.msra.mxu0 0
        %743 = vmatprep.subr.bf16.mxu0 0
        %744 = vmatpush1.bf16.msra.mxu0 0
        %745 = vmatprep.subr.bf16.mxu0 0
        %746 = vmatpush1.bf16.msra.mxu0 0
        %747 = vmatprep.subr.bf16.mxu0 0
        %748 = vmatpush1.bf16.msra.mxu0 0
        %749 = vmatprep.subr.bf16.mxu0 0
        %750 = vmatpush1.bf16.msra.mxu0 0
        %751 = vmatprep.subr.bf16.mxu0 0
        %752 = vmatpush1.bf16.msra.mxu0 0
        %753 = vmatprep.subr.bf16.mxu0 0
        %754 = vmatpush1.bf16.msra.mxu0 0
        %755 = vmatprep.subr.bf16.mxu0 0
        %756 = vmatpush1.bf16.msra.mxu0 0
        %757 = vmatprep.subr.bf16.mxu0 0
        %758 = vmatpush1.bf16.msra.mxu0 0
        %759 = vmatprep.subr.bf16.mxu0 0
        %760 = vmatpush1.bf16.msra.mxu0 0
        %761 = vmatprep.subr.bf16.mxu0 0
        %762 = vmatpush1.bf16.msra.mxu0 0
        %763 = vmatprep.subr.bf16.mxu0 0
        %764 = vmatpush1.bf16.msra.mxu0 0
        %765 = vmatprep.mubr.bf16.mxu0 0
        %766 = vmatmul.mubr.bf16.gmra.mrb[0].mxu0 %v728
        %v767 = vpop.f32.mrb[0].mxu0
        %v768 = vadd.f32 0.0, %v767
        %v769 = vpop.f32.mrb[0].mxu0
        %v770 = vpop.f32.mrb[0].mxu0
        %v771 = vpop.f32.mrb[0].mxu0
        %772 = vdwg.mxu0
        %v774 = vsel %vm443, %v674, 0
        %v777 = vsel %vm683, %v678, 0
        %779 = vmatprep.subr.bf16.mxu0 0
        %780 = vmatpush1.bf16.msra.mxu0 %v777
        %781 = vmatprep.subr.bf16.mxu0 0
        %782 = vmatpush1.bf16.msra.mxu0 0
        %783 = vmatprep.subr.bf16.mxu0 0
        %784 = vmatpush1.bf16.msra.mxu0 0
        %785 = vmatprep.subr.bf16.mxu0 0
        %786 = vmatpush1.bf16.msra.mxu0 0
        %787 = vmatprep.subr.bf16.mxu0 0
        %788 = vmatpush1.bf16.msra.mxu0 0
        %789 = vmatprep.subr.bf16.mxu0 0
        %790 = vmatpush1.bf16.msra.mxu0 0
        %791 = vmatprep.subr.bf16.mxu0 0
        %792 = vmatpush1.bf16.msra.mxu0 0
        %793 = vmatprep.subr.bf16.mxu0 0
        %794 = vmatpush1.bf16.msra.mxu0 0
        %795 = vmatprep.subr.bf16.mxu0 0
        %796 = vmatpush1.bf16.msra.mxu0 0
        %797 = vmatprep.subr.bf16.mxu0 0
        %798 = vmatpush1.bf16.msra.mxu0 0
        %799 = vmatprep.subr.bf16.mxu0 0
        %800 = vmatpush1.bf16.msra.mxu0 0
        %801 = vmatprep.subr.bf16.mxu0 0
        %802 = vmatpush1.bf16.msra.mxu0 0
        %803 = vmatprep.subr.bf16.mxu0 0
        %804 = vmatpush1.bf16.msra.mxu0 0
        %805 = vmatprep.subr.bf16.mxu0 0
        %806 = vmatpush1.bf16.msra.mxu0 0
        %807 = vmatprep.subr.bf16.mxu0 0
        %808 = vmatpush1.bf16.msra.mxu0 0
        %809 = vmatprep.subr.bf16.mxu0 0
        %810 = vmatpush1.bf16.msra.mxu0 0
        %811 = vmatprep.mubr.bf16.mxu0 0
        %812 = vmatmul.mubr.bf16.gmra.mrb[0].mxu0 %v774
        %v813 = vpop.f32.mrb[0].mxu0
        %v814 = vadd.f32 0.0, %v813
        %v815 = vpop.f32.mrb[0].mxu0
        %v816 = vpop.f32.mrb[0].mxu0
        %v817 = vpop.f32.mrb[0].mxu0
        %818 = vdwg.mxu0
        %v820 = vsel %vm443, %v675, 0
        %v823 = vsel %vm683, %v679, 0
        %825 = vmatprep.subr.bf16.mxu0 0
        %826 = vmatpush1.bf16.msra.mxu0 %v823
        %827 = vmatprep.subr.bf16.mxu0 0
        %828 = vmatpush1.bf16.msra.mxu0 0
        %829 = vmatprep.subr.bf16.mxu0 0
        %830 = vmatpush1.bf16.msra.mxu0 0
        %831 = vmatprep.subr.bf16.mxu0 0
        %832 = vmatpush1.bf16.msra.mxu0 0
        %833 = vmatprep.subr.bf16.mxu0 0
        %834 = vmatpush1.bf16.msra.mxu0 0
        %835 = vmatprep.subr.bf16.mxu0 0
        %836 = vmatpush1.bf16.msra.mxu0 0
        %837 = vmatprep.subr.bf16.mxu0 0
        %838 = vmatpush1.bf16.msra.mxu0 0
        %839 = vmatprep.subr.bf16.mxu0 0
        %840 = vmatpush1.bf16.msra.mxu0 0
        %841 = vmatprep.subr.bf16.mxu0 0
        %842 = vmatpush1.bf16.msra.mxu0 0
        %843 = vmatprep.subr.bf16.mxu0 0
        %844 = vmatpush1.bf16.msra.mxu0 0
        %845 = vmatprep.subr.bf16.mxu0 0
        %846 = vmatpush1.bf16.msra.mxu0 0
        %847 = vmatprep.subr.bf16.mxu0 0
        %848 = vmatpush1.bf16.msra.mxu0 0
        %849 = vmatprep.subr.bf16.mxu0 0
        %850 = vmatpush1.bf16.msra.mxu0 0
        %851 = vmatprep.subr.bf16.mxu0 0
        %852 = vmatpush1.bf16.msra.mxu0 0
        %853 = vmatprep.subr.bf16.mxu0 0
        %854 = vmatpush1.bf16.msra.mxu0 0
        %855 = vmatprep.subr.bf16.mxu0 0
        %856 = vmatpush1.bf16.msra.mxu0 0
        %857 = vmatprep.mubr.bf16.mxu0 0
        %858 = vmatmul.mubr.bf16.gmra.mrb[0].mxu0 %v820
        %v859 = vpop.f32.mrb[0].mxu0
        %v860 = vadd.f32 0.0, %v859
        %v861 = vpop.f32.mrb[0].mxu0
        %v862 = vpop.f32.mrb[0].mxu0
        %v863 = vpop.f32.mrb[0].mxu0
        %864 = vdwg.mxu0
        %vm865 = vcmask 60416
        %866 = vst.msk [vmem:[%s395] sm:$0xf] %vm865, %v672
        %867 = vst.msk [vmem:[%s395 + $0x4] sm:$0xf] %vm865, %v673
        %868 = vst.msk [vmem:[%s395 + $0x8] sm:$0xf] %vm865, %v674
        %869 = vst.msk [vmem:[%s395 + $0xc] sm:$0xf] %vm865, %v675
        %870 = vst.msk [vmem:[%s415] sm:$0xff] %vm443, %v722
        %872 = vrot.lane.b32.xlu0 %v768, 8
        %v873 = vpop.permute.xlu0 %872
        %vm875 = vcmask 130112
        %876 = vst.msk [vmem:[%s415] sm:$0xff] %vm875, %v873
        %878 = vrot.lane.b32.xlu0 %v814, 16
        %v879 = vpop.permute.xlu0 %878
        %vm881 = vcmask 195712
        %882 = vst.msk [vmem:[%s415] sm:$0xff] %vm881, %v879
        %884 = vrot.lane.b32.xlu0 %v860, 24
        %v885 = vpop.permute.xlu0 %884
        %vm887 = vcmask 261312
        %888 = vst.msk [vmem:[%s415] sm:$0xff] %vm887, %v885
        %p889 = scmp.lt.s32.totalorder %s31, 1
        %s890 = scalar_select %p889, %s31, 1
        %p891 = scmp.lt.s32.totalorder %s33, 0
        %s892 = scalar_select %p891, %s33, 0
        %p893 = scmp.lt.s32.totalorder %s32, 0
        %s894 = scalar_select %p893, %s32, 0
        %s895 = sadd.s32 %s894, %s892
        %s896 = sadd.s32 %s895, %s890
        %s897 = smul.addr %s896, 8
        %s898 = scalar_lea.vmem %s4, %s897
        %s899 = sand.u32 %s201, 1
        %s900 = scalar_lea.sflag [#allocation4], %s899
        %s901 = sand.u32 %s201, 1
        %s902 = smul.addr %s901, 16
        %s903 = scalar_lea.vmem [#allocation8], %s902
        // Predicated region
        $region49: #{scaled_dot_product_attention.1} parent=35 // pred_check
          %p904 = pneg %p181
        $region50: #{scaled_dot_product_attention.1} parent=35 // pred_check_branch
          %906 = sbr.rel (%p904) target = $region52
        $region51: #{scaled_dot_product_attention.1} parent=35 // pred_region
          _
        $region52: #{scaled_dot_product_attention.1} parent=35 // pred_fallthru
          _
        // Predicated region
        $region53: #{scaled_dot_product_attention.1} parent=35 // pred_check
          %p907 = pneg %p211
        $region54: #{scaled_dot_product_attention.1} parent=35 // pred_check_branch
          %909 = sbr.rel (%p907) target = $region56
        $region55: #{scaled_dot_product_attention.1} parent=35 // pred_region
          %s910 = smul.u32 4, %s32
          %s912 = ssub.s32 256, 256
          %913 = vsyncadd %s900, %s912
          %s914 = sadd.s32 %s33, %s910
          %s915 = smul.addr %s31, 4
          %s916 = sadd.s32 %s914, %s915
          %s917 = smul.addr %s916, 64
          %s918 = scalar_lea.hbm %s5, %s917
          %s919 = sshll.u32 %s903, 4
          %s920 = int_to_ptr.vmem [resolvable:$true] %s919
          %925 = dma.vmem_to_hbm [thread:$0]  %s920, 256, %s918, %s900, 64, 64, 4
        $region56: #{scaled_dot_product_attention.1} parent=35 // pred_fallthru
          _
      $region36: #{scaled_dot_product_attention.1} parent=5 // pred_fallthru
        _
      %p926 = scmp.le.s32.totalorder 2, %s21
      // Predicated region
      $region57: #{scaled_dot_product_attention.1} parent=5 // pred_check
        %p927 = pneg %p926
      $region58: #{scaled_dot_product_attention.1} parent=5 // pred_check_branch
        %929 = sbr.rel (%p927) target = $region60
      $region59: #{scaled_dot_product_attention.1} parent=5 // pred_region
        %s930 = ssub.s32 %s21, 2
        // Predicated region
        $region61: #{scaled_dot_product_attention.1} parent=59 // pred_check
          %p931 = pneg %p187
        $region62: #{scaled_dot_product_attention.1} parent=59 // pred_check_branch
          %933 = sbr.rel (%p931) target = $region64
        $region63: #{scaled_dot_product_attention.1} parent=59 // pred_region
          %p934 = scmp.lt.s32.totalorder %s34, 1
          %s935 = scalar_select %p934, %s34, 1
          %p936 = scmp.lt.s32.totalorder %s36, 0
          %s937 = scalar_select %p936, %s36, 0
          %p938 = scmp.lt.s32.totalorder %s35, 0
          %s939 = scalar_select %p938, %s35, 0
          %s940 = sadd.s32 %s939, %s937
          %s941 = sadd.s32 %s940, %s935
          %s942 = smul.addr %s941, 8
          %s943 = scalar_lea.vmem %s4, %s942
        $region64: #{scaled_dot_product_attention.1} parent=59 // pred_fallthru
          _
        // Predicated region
        $region65: #{scaled_dot_product_attention.1} parent=59 // pred_check
          %p944 = pneg %p217
        $region66: #{scaled_dot_product_attention.1} parent=59 // pred_check_branch
          %946 = sbr.rel (%p944) target = $region68
        $region67: #{scaled_dot_product_attention.1} parent=59 // pred_region
          %s947 = sand.u32 %s202, 1
          %s948 = scalar_lea.sflag [#allocation4], %s947
          %s949 = sand.u32 %s202, 1
          %s950 = smul.addr %s949, 16
          %s951 = scalar_lea.vmem [#allocation8], %s950
          %952 = dma.done %s948, 256
        $region68: #{scaled_dot_product_attention.1} parent=59 // pred_fallthru
          _
      $region60: #{scaled_dot_product_attention.1} parent=5 // pred_fallthru
        _
    $region6: #{scaled_dot_product_attention.1} parent=1 // loop_footer
      %s25 = sadd.s32 1, %s21
    $region7: #{scaled_dot_product_attention.1} parent=1 // loop_footer_branch
      %20 = sbr.rel target = $region3
    $region8: #{scaled_dot_product_attention.1} parent=1 // loop_exit
      _
    %953 = vsyncpa [#allocation3], 1
    %s954 = scalar_lea.sflag [#allocation3], 1
    %955 = vsyncpa %s954, 1
    %956 = vsyncpa [#allocation6], 1
    %s957 = scalar_lea.sflag [#allocation6], 1
    %958 = vsyncpa %s957, 1
    %959 = vsyncpa [#allocation4], 1
    %s960 = scalar_lea.sflag [#allocation4], 1
    %961 = vsyncpa %s960, 1

</llo_original>
